<compile_context>
chip_gen: v6e
topology: v6e:2x2x1
jax: 0.10.0
libtpu: 0.0.40
codegen_flags: <defaults>
</compile_context>

<pallas_src>
import jax
import jax.numpy as jnp
from jax import lax
from jax.experimental import pallas as pl
from jax.experimental.pallas import tpu as pltpu

EPS = 1e-12
_LANES = 128
_ACC_ROWS_MAX = 64  # up to 8 independent (8,128) accumulator vregs


def _round_up(x: int, m: int) -> int:
    return (x + m - 1) // m * m


def _sublane_multiple(itemsize: int) -> int:
    # Sub-32-bit dtypes pack along sublanes: 8 rows for 4-byte elements,
    # 16 for 2-byte (bf16), 32 for 1-byte (int8/fp8).
    return max(8, 32 // max(int(itemsize), 1))


def _chip_profile():
    """Returns (TensorCores per Pallas device, per-input per-buffer VMEM budget)."""
    kind = ""
    try:
        kind = jax.devices()[0].device_kind.lower()
    except Exception:  # defensive: unknown backends fall back to safe defaults
        pass
    compact = kind.replace(" ", "")
    if "v7" in compact or "tpu7" in compact:
        return 2, 4 << 20          # v7x: 2 TCs/device, 64 MiB VMEM per TC
    if "v5e" in compact or "v5lite" in compact:
        return 1, 2 << 20          # v5e: stay inside the 16 MiB default scoped VMEM
    return 1, 4 << 20              # v6e and other single-TC parts


def _make_kernel(block_rows, acc_rows, blocks_per_slice, n_blocks_total,
                 tail_valid_rows, overcovered):
    """Build the kernel body with all sizes baked in statically."""
    group = block_rows // acc_rows
    has_partial_tail = tail_valid_rows != block_rows
    last_real = n_blocks_total - 1

    def kernel(p_ref, t_ref, partial_ref, acc_ref):
        s = pl.program_id(0)   # slice axis (one per TensorCore on v7x)
        i = pl.program_id(1)   # sequential reduction axis within the slice

        @pl.when(i == 0)
        def _init():
            acc_ref[...] = jnp.zeros_like(acc_ref)

        blk = s * blocks_per_slice + i

        def accumulate(valid_rows):
            # Inputs are streamed in their native dtype; cast in-kernel.
            p = p_ref[...].astype(jnp.float32)
            t = t_ref[...].astype(jnp.float32)
            p = jnp.clip(p, EPS, 1.0 - EPS)          # clamp(preds, eps, 1 - eps)
            d = p - t
            dd = d * d
            if valid_rows is not None:
                # Static row mask for the single ragged tail block. Keep the
                # select form: Pallas-padded rows may hold garbage (even NaN).
                row_ids = lax.broadcasted_iota(jnp.int32, (block_rows, _LANES), 0)
                dd = jnp.where(row_ids < valid_rows, dd, jnp.float32(0.0))
            # Sublane-aligned partial reduction into an (acc_rows, 128)
            # accumulator: pure VPU elementwise adds, no per-step cross-lane
            # (XLU) reduce; acc_rows/8 independent vregs give the VALUs ILP.
            acc_ref[...] += jnp.sum(dd.reshape(group, acc_rows, _LANES), axis=0)

        if not has_partial_tail and not overcovered:
            # Steady state only: no masking, no branches in the hot loop.
            accumulate(None)
        else:
            steady_limit = last_real if has_partial_tail else n_blocks_total
            if steady_limit > 0:
                @pl.when(blk < steady_limit)
                def _steady():
                    accumulate(None)
            if has_partial_tail:
                @pl.when(blk == last_real)
                def _tail():
                    accumulate(tail_valid_rows)
            # blk > last_real: duplicated slot of an over-covered slice; skipped
            # entirely (its re-read of the last block contributes nothing).

        @pl.when(i == pl.num_programs(1) - 1)
        def _finalize():
            # Collapse the accumulator to a single (8, 128) vreg per slice; the
            # final cross-lane reduce / mean / sqrt happen on the host.
            partial_ref[0] = jnp.sum(
                acc_ref[...].reshape(acc_rows // 8, 8, _LANES), axis=0)

    return kernel


def rmse_pallas(preds: jax.Array, targets: jax.Array) -> jax.Array:
    assert preds.shape == targets.shape, "preds/targets must have the same shape"
    n_total = preds.size
    assert n_total > 0

    p_flat = preds.reshape(-1)
    t_flat = targets.reshape(-1)

    # Ragged (< 128 element) tail: fold it in with plain JAX instead of padding
    # both tensors with a full-copy concatenate. The lane-aligned common case is
    # a zero-copy reshape straight into the kernel.
    rem = n_total % _LANES
    aligned = n_total - rem
    tail_sum = jnp.float32(0.0)
    if rem:
        p_tail = jnp.clip(p_flat[aligned:].astype(jnp.float32), EPS, 1.0 - EPS)
        t_tail = t_flat[aligned:].astype(jnp.float32)
        tail_sum = jnp.sum((p_tail - t_tail) ** 2)
        if aligned == 0:
            # Tiny input (< 128 elements): no kernel launch needed.
            return jnp.sqrt(tail_sum / jnp.float32(n_total))
        # NOTE: this prefix slice may materialize one copy of the aligned part,
        # but it writes no padding and the common aligned path stays zero-copy.
        p_flat = p_flat[:aligned]
        t_flat = t_flat[:aligned]

    rows = aligned // _LANES
    p2d = p_flat.reshape(rows, _LANES)
    t2d = t_flat.reshape(rows, _LANES)

    item_p = jnp.dtype(preds.dtype).itemsize
    item_t = jnp.dtype(targets.dtype).itemsize
    sub = max(_sublane_multiple(item_p), _sublane_multiple(item_t))

    num_cores, per_buf_bytes = _chip_profile()

    # Block rows: as large as the per-chip VMEM budget allows (amortizes the
    # ~0.35 us per-grid-step overhead against HBM bandwidth), rounded to the
    # packed-sublane multiple of the streamed dtype (8 f32 / 16 bf16 / 32 int8).
    max_block_rows = min(per_buf_bytes // (_LANES * item_p),
                         per_buf_bytes // (_LANES * item_t))
    max_block_rows = max((max_block_rows // sub) * sub, sub)
    block_rows = min(max_block_rows, _round_up(rows, sub))

    n_blocks_total = pl.cdiv(rows, block_rows)
    num_slices = num_cores if (num_cores > 1 and n_blocks_total >= num_cores) else 1
    blocks_per_slice = pl.cdiv(n_blocks_total, num_slices)
    overcovered = num_slices * blocks_per_slice > n_blocks_total
    tail_valid_rows = rows - (n_blocks_total - 1) * block_rows

    # Accumulator rows: widest power-of-two (<= 64) that divides the block.
    acc_rows = _ACC_ROWS_MAX
    while block_rows % acc_rows:
        acc_rows //= 2

    if overcovered:
        def in_map(s, i):
            # Duplicated slots re-read the last block; their contribution is
            # skipped in-kernel.
            return (jnp.minimum(s * blocks_per_slice + i, n_blocks_total - 1), 0)
    else:
        def in_map(s, i):
            return (s * blocks_per_slice + i, 0)

    block_bytes = block_rows * _LANES * (item_p + item_t)
    vmem_limit = (2 * block_bytes                    # double-buffered inputs
                  + acc_rows * _LANES * 4            # accumulator scratch
                  + num_slices * 8 * _LANES * 4      # partial-sum output
                  + (2 << 20))                       # headroom
    vmem_limit = int(min(max(vmem_limit, 16 << 20), 64 << 20))

    slice_sem = pltpu.CORE_PARALLEL if num_slices > 1 else pltpu.ARBITRARY

    partials = pl.pallas_call(
        _make_kernel(block_rows, acc_rows, blocks_per_slice, n_blocks_total,
                     tail_valid_rows, overcovered),
        out_shape=jax.ShapeDtypeStruct((num_slices, 8, _LANES), jnp.float32),
        grid_spec=pltpu.PrefetchScalarGridSpec(
            num_scalar_prefetch=0,
            grid=(num_slices, blocks_per_slice),
            in_specs=[
                pl.BlockSpec((block_rows, _LANES), in_map),
                pl.BlockSpec((block_rows, _LANES), in_map),
            ],
            out_specs=pl.BlockSpec((1, 8, _LANES), lambda s, i: (s, 0, 0)),
            scratch_shapes=[pltpu.VMEM((acc_rows, _LANES), jnp.float32)],
        ),
        compiler_params=pltpu.CompilerParams(
            # Slice axis lands on separate TensorCores on v7x (CORE_PARALLEL);
            # the reduction axis stays sequential.
            dimension_semantics=(slice_sem, pltpu.ARBITRARY),
            vmem_limit_bytes=vmem_limit,
        ),
    )(p2d, t2d)

    # Tiny epilogue in JAX: combine per-core partial sums + ragged tail, mean, sqrt.
    mse = (jnp.sum(partials, dtype=jnp.float32) + tail_sum) / jnp.float32(n_total)
    return jnp.sqrt(mse)


if __name__ == "__main__":
    key = jax.random.PRNGKey(0)
    k1, k2 = jax.random.split(key)

    # Shapes consistent with a typical prediction tensor (NCHW).
    preds = jax.random.uniform(k1, (2, 4, 16, 16), dtype=jnp.float32)
    targets = jax.random.uniform(k2, (2, 4, 16, 16), dtype=jnp.float32)

    rmse = jax.block_until_ready(rmse_pallas(preds, targets))

    # Reference check in plain JAX (mirrors the PyTorch forward).
    ref = jnp.sqrt(jnp.mean((jnp.clip(preds, EPS, 1.0 - EPS) - targets) ** 2))
    assert jnp.allclose(rmse, ref, rtol=1e-6, atol=1e-6), (rmse, ref)

    print("KERNEL_OK")
</pallas_src>

<mosaic_0001>
module attributes {stable_mosaic.version = 11 : i64} {
  func.func @kernel(%arg0: i32, %arg1: i32, %arg2: memref<16x128xf32, #tpu.memory_space<vmem>>, %arg3: memref<16x128xf32, #tpu.memory_space<vmem>>, %arg4: memref<1x8x128xf32, #tpu.memory_space<vmem>>, %arg5: memref<16x128xf32, #tpu.memory_space<vmem>>) attributes {dimension_semantics = [#tpu.dimension_semantics<arbitrary>, #tpu.dimension_semantics<arbitrary>], iteration_bounds = array<i64: 1, 1>, scalar_prefetch = 0 : i64, scratch_operands = 1 : i64, tpu.core_type = #tpu.core_type<tc>, window_params = [{transform_indices = @transform_0, window_bounds = array<i64: 16, 128>}, {transform_indices = @transform_1, window_bounds = array<i64: 16, 128>}, {transform_indices = @transform_2, window_bounds = array<i64: 1, 8, 128>}]} {
    %c0_i32 = arith.constant 0 : i32
    %0 = arith.cmpi eq, %arg1, %c0_i32 : i32
    %1 = arith.extui %0 : i1 to i32
    %c0_i32_0 = arith.constant 0 : i32
    %2 = arith.cmpi ne, %1, %c0_i32_0 : i32
    scf.if %2 {
      %cst_12 = arith.constant 0.000000e+00 : f32
      %19 = vector.broadcast %cst_12 : f32 to vector<16x128xf32>
      %c0_13 = arith.constant 0 : index
      %c0_14 = arith.constant 0 : index
      %20 = vector.load %arg5[%c0_13, %c0_14] : memref<16x128xf32, #tpu.memory_space<vmem>>, vector<16x128xf32>
      tpu.vector_store %arg5[%c0_13, %c0_14], %19 {strides = array<i32>} : memref<16x128xf32, #tpu.memory_space<vmem>>, vector<16x128xf32>,
    } else {
    }
    %c0 = arith.constant 0 : index
    %c0_1 = arith.constant 0 : index
    %3 = vector.load %arg2[%c0, %c0_1] : memref<16x128xf32, #tpu.memory_space<vmem>>, vector<16x128xf32>
    %c0_2 = arith.constant 0 : index
    %c0_3 = arith.constant 0 : index
    %4 = vector.load %arg3[%c0_2, %c0_3] : memref<16x128xf32, #tpu.memory_space<vmem>>, vector<16x128xf32>
    %cst = arith.constant 9.99999996E-13 : f32
    %cst_4 = arith.constant 1.000000e+00 : f32
    %5 = vector.broadcast %cst : f32 to vector<16x128xf32>
    %6 = arith.maximumf %5, %3 : vector<16x128xf32>
    %7 = vector.broadcast %cst_4 : f32 to vector<16x128xf32>
    %8 = arith.minimumf %7, %6 : vector<16x128xf32>
    %9 = arith.subf %8, %4 : vector<16x128xf32>
    %10 = arith.mulf %9, %9 : vector<16x128xf32>
    %c0_5 = arith.constant 0 : index
    %c0_6 = arith.constant 0 : index
    %11 = vector.load %arg5[%c0_5, %c0_6] : memref<16x128xf32, #tpu.memory_space<vmem>>, vector<16x128xf32>
    %12 = vector.shape_cast %10 : vector<16x128xf32> to vector<1x16x128xf32>
    %cst_7 = arith.constant dense<0.000000e+00> : vector<16x128xf32>
    %13 = vector.multi_reduction <add>, %12, %cst_7 [0] : vector<1x16x128xf32> to vector<16x128xf32>
    %14 = arith.addf %11, %13 : vector<16x128xf32>
    %c0_8 = arith.constant 0 : index
    %c0_9 = arith.constant 0 : index
    %15 = vector.load %arg5[%c0_8, %c0_9] : memref<16x128xf32, #tpu.memory_space<vmem>>, vector<16x128xf32>
    tpu.vector_store %arg5[%c0_8, %c0_9], %14 {strides = array<i32>} : memref<16x128xf32, #tpu.memory_space<vmem>>, vector<16x128xf32>,
    %c0_i32_10 = arith.constant 0 : i32
    %16 = arith.cmpi eq, %arg1, %c0_i32_10 : i32
    %17 = arith.extui %16 : i1 to i32
    %c0_i32_11 = arith.constant 0 : i32
    %18 = arith.cmpi ne, %17, %c0_i32_11 : i32
    scf.if %18 {
      %c0_12 = arith.constant 0 : index
      %c0_13 = arith.constant 0 : index
      %19 = vector.load %arg5[%c0_12, %c0_13] : memref<16x128xf32, #tpu.memory_space<vmem>>, vector<16x128xf32>
      %20 = vector.shape_cast %19 : vector<16x128xf32> to vector<2x8x128xf32>
      %cst_14 = arith.constant dense<0.000000e+00> : vector<8x128xf32>
      %21 = vector.multi_reduction <add>, %20, %cst_14 [0] : vector<2x8x128xf32> to vector<8x128xf32>
      %c0_15 = arith.constant 0 : index
      %c0_16 = arith.constant 0 : index
      %c0_17 = arith.constant 0 : index
      %22 = vector.load %arg4[%c0_15, %c0_16, %c0_17] : memref<1x8x128xf32, #tpu.memory_space<vmem>>, vector<1x8x128xf32>
      %23 = vector.shape_cast %22 : vector<1x8x128xf32> to vector<8x128xf32>
      %24 = vector.shape_cast %21 : vector<8x128xf32> to vector<1x8x128xf32>
      tpu.vector_store %arg4[%c0_15, %c0_16, %c0_17], %24 {strides = array<i32>} : memref<1x8x128xf32, #tpu.memory_space<vmem>>, vector<1x8x128xf32>,
    } else {
    }
    return
  }
  func.func @transform_0(%arg0: i32, %arg1: i32) -> (i32, i32) {
    %c1_i32 = arith.constant 1 : i32
    %0 = arith.muli %arg0, %c1_i32 : i32
    %1 = arith.addi %0, %arg1 : i32
    %c0_i32 = arith.constant 0 : i32
    %c0_i32_0 = arith.constant 0 : i32
    return %1, %c0_i32 : i32, i32
  }
  func.func @transform_1(%arg0: i32, %arg1: i32) -> (i32, i32) {
    %c1_i32 = arith.constant 1 : i32
    %0 = arith.muli %arg0, %c1_i32 : i32
    %1 = arith.addi %0, %arg1 : i32
    %c0_i32 = arith.constant 0 : i32
    %c0_i32_0 = arith.constant 0 : i32
    return %1, %c0_i32 : i32, i32
  }
  func.func @transform_2(%arg0: i32, %arg1: i32) -> (i32, i32, i32) {
    %c0_i32 = arith.constant 0 : i32
    %c0_i32_0 = arith.constant 0 : i32
    %c0_i32_1 = arith.constant 0 : i32
    return %arg0, %c0_i32, %c0_i32_0 : i32, i32, i32
  }
}

</mosaic_0001>

<llo_original>
// kernel: tpu_custom_call.1
$region0: #{tpu_custom_call.1}
  #allocation0 [shape = 'u32[]', space=smem, size = 0x4, offset = 0x4, fixed_abs, tag = 'smem constant byte address 0x4 - core index']
  #allocation1 [shape = 'u32[144,128]{1,0:T(1,128)}', space=vmem, size = 0x12000, scoped, tag = 'internal scratch']
  #allocation2 [shape = 'f32[16,128]{1,0:T(8,128)}', space=vmem, size = 0x2000, scoped, tag = 'scratch operand']
  %s0 = inlined_call_operand.hbm [shape: f32[16,128], index: 0, kind: input, shape index: {}]
  %s1 = inlined_call_operand.hbm [shape: f32[16,128], index: 1, kind: input, shape index: {}]
  %s2 = inlined_call_operand.hbm [shape: f32[1,8,128], index: 2, kind: output, shape index: {}]
  %s3 = sld [smem:[#allocation0]]
  $region34: #{tpu_custom_call.1} parent=0
    _
  %s5 = ssub.s32 1, %s3
  %s6 = scalar_select 0, %s5, %s3
  $region1: #{tpu_custom_call.1} parent=0
    #allocation3 [shape = 'u8[8192]{0}', space=vmem, size = 0x2000, scoped, tag = 'input window, operand 0, single buffered']
    #allocation4 [shape = 's32[1]{0}', space=sflag, size = 0x4, scoped, tag = 'scoped memory for tpu_custom_call.1']
    #allocation5 [shape = 's32[1]{0}', space=sflag, size = 0x4, scoped, tag = 'scoped memory for tpu_custom_call.1']
    #allocation6 [shape = 'u8[8192]{0}', space=vmem, size = 0x2000, scoped, tag = 'input window, operand 1, single buffered']
    #allocation7 [shape = 's32[1]{0}', space=sflag, size = 0x4, scoped, tag = 'scoped memory for tpu_custom_call.1']
    #allocation8 [shape = 'u8[4096]{0}', space=vmem, size = 0x1000, scoped, tag = 'output window, operand 0, single buffered']
    %7 = vsyncpa [#allocation4], 0
    %8 = vsyncpa [#allocation7], 0
    %9 = vsyncpa [#allocation5], 0
    // Predicated region
    $region2: #{tpu_custom_call.1} parent=1 // pred_check
      _
    $region3: #{tpu_custom_call.1} parent=1 // pred_check_branch
      %11 = sbr.rel (0) target = $region5
    $region4: #{tpu_custom_call.1} parent=1 // pred_region
      %s12 = sadd.s32 0, 0
      %s13 = smul.u32 2, %s12
      %s15 = ssub.s32 256, 256
      %16 = vsyncadd [#allocation4], %s15
      %s17 = smul.addr %s13, 128
      %s18 = scalar_lea.hbm %s0, %s17
      %s19 = sshll.u32 [#allocation3], 4
      %s20 = int_to_ptr.vmem [resolvable:$true] %s19
      %25 = dma.hbm_to_vmem [thread:$0]  %s18, 256, %s20, [#allocation4], 128, 128, 8
    $region5: #{tpu_custom_call.1} parent=1 // pred_fallthru
      _
    // Predicated region
    $region6: #{tpu_custom_call.1} parent=1 // pred_check
      _
    $region7: #{tpu_custom_call.1} parent=1 // pred_check_branch
      %27 = sbr.rel (0) target = $region9
    $region8: #{tpu_custom_call.1} parent=1 // pred_region
      %s28 = sadd.s32 0, 0
      %s29 = smul.u32 2, %s28
      %s31 = ssub.s32 256, 256
      %32 = vsyncadd [#allocation7], %s31
      %s33 = smul.addr %s29, 128
      %s34 = scalar_lea.hbm %s1, %s33
      %s35 = sshll.u32 [#allocation6], 4
      %s36 = int_to_ptr.vmem [resolvable:$true] %s35
      %41 = dma.hbm_to_vmem [thread:$0]  %s34, 256, %s36, [#allocation7], 128, 128, 8
    $region9: #{tpu_custom_call.1} parent=1 // pred_fallthru
      _
    // Predicated region
    $region10: #{tpu_custom_call.1} parent=1 // pred_check
      _
    $region11: #{tpu_custom_call.1} parent=1 // pred_check_branch
      %43 = sbr.rel (0) target = $region13
    $region12: #{tpu_custom_call.1} parent=1 // pred_region
      %44 = dma.done [#allocation4], 256
    $region13: #{tpu_custom_call.1} parent=1 // pred_fallthru
      _
    // Predicated region
    $region14: #{tpu_custom_call.1} parent=1 // pred_check
      _
    $region15: #{tpu_custom_call.1} parent=1 // pred_check_branch
      %46 = sbr.rel (0) target = $region17
    $region16: #{tpu_custom_call.1} parent=1 // pred_region
      %47 = dma.done [#allocation7], 256
    $region17: #{tpu_custom_call.1} parent=1 // pred_fallthru
      _
    %s48 = sadd.s32 0, 0
    %s49 = smul.u32 2, %s48
    %s50 = sadd.s32 0, 0
    %s51 = smul.u32 2, %s50
    %p52 = scmp.eq.s32.totalorder 0, 0
    // Predicated region
    $region18: #{tpu_custom_call.1} parent=1 // pred_check
      %p53 = pneg %p52
    $region19: #{tpu_custom_call.1} parent=1 // pred_check_branch
      %55 = sbr.rel (%p53) target = $region21
    $region20: #{tpu_custom_call.1} parent=1 // pred_region
      %56 = vst [vmem:[#allocation2] sm:$0xff] 0.0
      %57 = vst [vmem:[#allocation2 + $0x8] sm:$0xff] 0.0
    $region21: #{tpu_custom_call.1} parent=1 // pred_fallthru
      _
    %v58 = vld [vmem:[#allocation3] sm:$0xff]
    %v59 = vld [vmem:[#allocation3 + $0x8] sm:$0xff]
    %v60 = vld [vmem:[#allocation6] sm:$0xff]
    %v61 = vld [vmem:[#allocation6 + $0x8] sm:$0xff]
    %v62 = vmax.f32 %v58, 1e-12
    %v63 = vmax.f32 %v59, 1e-12
    %v64 = vmin.f32 %v62, 1.0
    %v65 = vmin.f32 %v63, 1.0
    %v66 = vsub.f32 %v64, %v60
    %v67 = vsub.f32 %v65, %v61
    %v68 = vmul.f32 %v66, %v66
    %v69 = vmul.f32 %v67, %v67
    %v70 = vld [vmem:[#allocation2] sm:$0xff]
    %v71 = vld [vmem:[#allocation2 + $0x8] sm:$0xff]
    %v72 = vadd.f32 %v68, 0.0
    %v73 = vadd.f32 %v69, 0.0
    %v74 = vadd.f32 %v70, %v72
    %v75 = vadd.f32 %v71, %v73
    %76 = vst [vmem:[#allocation2] sm:$0xff] %v74
    %77 = vst [vmem:[#allocation2 + $0x8] sm:$0xff] %v75
    // Predicated region
    $region22: #{tpu_custom_call.1} parent=1 // pred_check
      %p78 = pneg %p52
    $region23: #{tpu_custom_call.1} parent=1 // pred_check_branch
      %80 = sbr.rel (%p78) target = $region25
    $region24: #{tpu_custom_call.1} parent=1 // pred_region
      %v81 = vld [vmem:[#allocation2] sm:$0xff]
      %v82 = vld [vmem:[#allocation2 + $0x8] sm:$0xff]
      %v83 = vadd.f32 %v81, %v82
      %84 = vst [vmem:[#allocation8] sm:$0xff] %v83
    $region25: #{tpu_custom_call.1} parent=1 // pred_fallthru
      _
    // Predicated region
    $region26: #{tpu_custom_call.1} parent=1 // pred_check
      _
    $region27: #{tpu_custom_call.1} parent=1 // pred_check_branch
      %86 = sbr.rel (0) target = $region29
    $region28: #{tpu_custom_call.1} parent=1 // pred_region
      %s88 = ssub.s32 128, 128
      %89 = vsyncadd [#allocation5], %s88
      %s91 = sshll.u32 [#allocation8], 4
      %s92 = int_to_ptr.vmem [resolvable:$true] %s91
      %94 = dma.vmem_to_hbm [thread:$0]  %s92, 128, %s2, [#allocation5]
    $region29: #{tpu_custom_call.1} parent=1 // pred_fallthru
      _
    // Predicated region
    $region30: #{tpu_custom_call.1} parent=1 // pred_check
      _
    $region31: #{tpu_custom_call.1} parent=1 // pred_check_branch
      %96 = sbr.rel (0) target = $region33
    $region32: #{tpu_custom_call.1} parent=1 // pred_region
      %97 = dma.done [#allocation5], 128
    $region33: #{tpu_custom_call.1} parent=1 // pred_fallthru
      _
    %98 = vsyncpa [#allocation4], 1
    %99 = vsyncpa [#allocation7], 1
    %100 = vsyncpa [#allocation5], 1

</llo_original>
